<compile_context>
chip_gen: v6e
topology: v6e:2x2x1
jax: 0.10.0
libtpu: 0.0.40
codegen_flags: <defaults>
</compile_context>

<pallas_src>
import jax
import jax.numpy as jnp
from jax.experimental import pallas as pl
from jax.experimental.pallas import tpu as pltpu

LANE = 128
SUBLANE = 8


def _round_up(x, m):
    return ((x + m - 1) // m) * m


def _pad2d(a, rows, cols, dtype):
    r, c = a.shape
    return jnp.pad(a.astype(dtype), ((0, rows - r), (0, cols - c)))


def mlp_kernel(x_ref, w1_ref, b1_ref, w2_ref, b2_ref, w3_ref, b3_ref, o_ref):
    # In-kernel f32 -> bf16 cast of the activation tile (VPU, hidden under
    # the MXU); all matmuls accumulate in f32 on the MXU.
    x = x_ref[...].astype(jnp.bfloat16)
    # Layer 1: bias-add + ReLU fused on the VPU in f32.
    h = jnp.maximum(
        jnp.dot(x, w1_ref[...], preferred_element_type=jnp.float32) + b1_ref[...],
        0.0,
    )
    # Layer 2
    h = jnp.maximum(
        jnp.dot(h.astype(jnp.bfloat16), w2_ref[...],
                preferred_element_type=jnp.float32) + b2_ref[...],
        0.0,
    )
    # Layer 3: logits, lane-dense (128-wide) unmasked store.
    o_ref[...] = (
        jnp.dot(h.astype(jnp.bfloat16), w3_ref[...],
                preferred_element_type=jnp.float32) + b3_ref[...]
    ).astype(o_ref.dtype)


def prepare_params(w1, b1, w2, b2, w3, b3):
    """One-time parameter prep (do this at init, NOT per forward call).

    Weights are stored pre-transposed as (in_features, out_features) and their
    output (lane) dims zero-padded to multiples of 128; biases become
    (1, out_padded) f32. Padded columns carry zero weights/biases so they pass
    through ReLU as zeros and never contaminate real lanes. The input-feature
    (K) dim of w1 is left unpadded so x can be fed to the kernel as-is.
    """
    in_dim, hid1 = w1.shape
    hid2 = w2.shape[1]
    out_dim = w3.shape[1]
    h1_p = _round_up(hid1, LANE)
    h2_p = _round_up(hid2, LANE)
    out_p = _round_up(out_dim, LANE)

    params = (
        _pad2d(w1, in_dim, h1_p, jnp.bfloat16),
        _pad2d(b1, 1, h1_p, jnp.float32),
        _pad2d(w2, h1_p, h2_p, jnp.bfloat16),
        _pad2d(b2, 1, h2_p, jnp.float32),
        _pad2d(w3, h2_p, out_p, jnp.bfloat16),
        _pad2d(b3, 1, out_p, jnp.float32),
    )
    return params, out_dim


def mlp_forward(x, params, out_dim, *, block_b=1024, out_dtype=jnp.float32):
    """Fused 3-layer MLP forward: relu(relu(x@W1+b1)@W2+b2)@W3+b3."""
    w1_p, b1_p, w2_p, b2_p, w3_p, b3_p = params
    B, in_dim = x.shape
    h1_p = w1_p.shape[1]
    h2_p = w2_p.shape[1]
    out_p = w3_p.shape[1]

    # Batch tile: multiple of 8 sublanes; default 1024 to amortize per-step
    # overhead. If that would give a single grid step but the batch can be
    # split, halve the tile so v7x's two TensorCores both get work.
    b8 = _round_up(B, SUBLANE)
    tb = _round_up(min(block_b, b8), SUBLANE)
    if b8 > SUBLANE and pl.cdiv(b8, tb) < 2:
        tb = _round_up(pl.cdiv(b8, 2), SUBLANE)
    b_pad = _round_up(B, tb)
    grid = (b_pad // tb,)

    # Only pad batch rows (rare, cheap); feature dim and dtype are untouched,
    # so in the common case x goes straight to the kernel with no extra HBM pass.
    x_in = x if b_pad == B else jnp.pad(x, ((0, b_pad - B), (0, 0)))

    flops = 2 * b_pad * (in_dim * h1_p + h1_p * h2_p + h2_p * out_p)
    bytes_accessed = (
        x_in.size * x_in.dtype.itemsize
        + (w1_p.size + w2_p.size + w3_p.size) * 2
        + (b1_p.size + b2_p.size + b3_p.size) * 4
        + b_pad * out_p * jnp.dtype(out_dtype).itemsize
    )

    def resident(i):  # weights / biases: same block every grid step (VMEM-resident)
        return (0, 0)

    out_padded = pl.pallas_call(
        mlp_kernel,
        out_shape=jax.ShapeDtypeStruct((b_pad, out_p), out_dtype),
        grid=grid,
        in_specs=[
            pl.BlockSpec((tb, in_dim), lambda i: (i, 0)),  # x: tiled over batch
            pl.BlockSpec((in_dim, h1_p), resident),        # w1
            pl.BlockSpec((1, h1_p), resident),             # b1
            pl.BlockSpec((h1_p, h2_p), resident),          # w2
            pl.BlockSpec((1, h2_p), resident),             # b2
            pl.BlockSpec((h2_p, out_p), resident),         # w3
            pl.BlockSpec((1, out_p), resident),            # b3
        ],
        out_specs=pl.BlockSpec((tb, out_p), lambda i: (i, 0)),
        compiler_params=pltpu.CompilerParams(
            dimension_semantics=("parallel",),
        ),
        cost_estimate=pl.CostEstimate(
            flops=flops, transcendentals=0, bytes_accessed=bytes_accessed
        ),
    )(x_in, w1_p, b1_p, w2_p, b2_p, w3_p, b3_p)

    # Slice off padded rows/lanes; keep this inside the surrounding jit so it
    # fuses into the consumer rather than making another HBM pass.
    return out_padded[:B, :out_dim]


def init_linear_params(key, in_features, out_features):
    """Deterministic init matching PyTorch nn.Linear's default:
    U(-1/sqrt(in_features), 1/sqrt(in_features)) for weight and bias.
    Weight returned already transposed to (in_features, out_features)."""
    kw, kb = jax.random.split(key)
    bound = 1.0 / jnp.sqrt(jnp.float32(in_features))
    w = jax.random.uniform(kw, (in_features, out_features), jnp.float32,
                           minval=-bound, maxval=bound)
    b = jax.random.uniform(kb, (1, out_features), jnp.float32,
                           minval=-bound, maxval=bound)
    return w, b


if __name__ == "__main__":
    # Small shapes consistent with Network(input_dim, hidden_dim, output_dim).
    batch = 64
    input_dim = 64
    hidden_dim = 32
    output_dim = 10

    key = jax.random.PRNGKey(0)
    kx, k1, k2, k3 = jax.random.split(key, 4)

    x = jax.random.normal(kx, (batch, input_dim), jnp.float32)
    w1, b1 = init_linear_params(k1, input_dim, hidden_dim)
    w2, b2 = init_linear_params(k2, hidden_dim, hidden_dim)
    w3, b3 = init_linear_params(k3, hidden_dim, output_dim)

    # One-time parameter prep (padding + bf16 cast happens once, not per call).
    params, _ = prepare_params(w1, b1, w2, b2, w3, b3)

    @jax.jit
    def fwd(x, params):
        # block_b large by default; with batch=64 the wrapper splits the grid
        # into 2 steps of 32 rows so the resident-weight + multi-step path is
        # exercised (and both v7x TensorCores would get work).
        return mlp_forward(x, params, output_dim, block_b=1024)

    out = jax.block_until_ready(fwd(x, params))
    assert out.shape == (batch, output_dim)
    assert out.dtype == jnp.float32

    # Reference 1: identical bf16-in / f32-accumulate math in plain JAX.
    def ref_bf16(x, w1, b1, w2, b2, w3, b3):
        h = jnp.dot(x.astype(jnp.bfloat16), w1.astype(jnp.bfloat16),
                    preferred_element_type=jnp.float32) + b1
        h = jnp.maximum(h, 0.0)
        h = jnp.dot(h.astype(jnp.bfloat16), w2.astype(jnp.bfloat16),
                    preferred_element_type=jnp.float32) + b2
        h = jnp.maximum(h, 0.0)
        return jnp.dot(h.astype(jnp.bfloat16), w3.astype(jnp.bfloat16),
                       preferred_element_type=jnp.float32) + b3

    ref = ref_bf16(x, w1, b1, w2, b2, w3, b3)
    assert jnp.allclose(out, ref, atol=2e-3, rtol=2e-3), "bf16-matched ref mismatch"

    # Reference 2: pure f32 math (module semantics) — coarse check that bf16
    # quantization error stays small.
    ref32 = jnp.maximum(x @ w1 + b1, 0.0)
    ref32 = jnp.maximum(ref32 @ w2 + b2, 0.0)
    ref32 = ref32 @ w3 + b3
    assert jnp.allclose(out, ref32, atol=5e-2, rtol=5e-2), "f32 ref mismatch"

    print("KERNEL_OK")
</pallas_src>

<mosaic_0001>
module attributes {stable_mosaic.version = 11 : i64} {
  func.func @mlp_kernel(%arg0: i32, %arg1: memref<32x64xf32, #tpu.memory_space<vmem>>, %arg2: memref<64x128xbf16, #tpu.memory_space<vmem>>, %arg3: memref<1x128xf32, #tpu.memory_space<vmem>>, %arg4: memref<128x128xbf16, #tpu.memory_space<vmem>>, %arg5: memref<1x128xf32, #tpu.memory_space<vmem>>, %arg6: memref<128x128xbf16, #tpu.memory_space<vmem>>, %arg7: memref<1x128xf32, #tpu.memory_space<vmem>>, %arg8: memref<32x128xf32, #tpu.memory_space<vmem>>) attributes {dimension_semantics = [#tpu.dimension_semantics<parallel>], iteration_bounds = array<i64: 2>, scalar_prefetch = 0 : i64, scratch_operands = 0 : i64, tpu.core_type = #tpu.core_type<tc>, window_params = [{transform_indices = @transform_0, window_bounds = array<i64: 32, 64>}, {pipeline_mode = #tpu.pipeline_mode<synchronous>, transform_indices = @transform_1, window_bounds = array<i64: 64, 128>}, {pipeline_mode = #tpu.pipeline_mode<synchronous>, transform_indices = @transform_2, window_bounds = array<i64: 1, 128>}, {pipeline_mode = #tpu.pipeline_mode<synchronous>, transform_indices = @transform_3, window_bounds = array<i64: 128, 128>}, {pipeline_mode = #tpu.pipeline_mode<synchronous>, transform_indices = @transform_4, window_bounds = array<i64: 1, 128>}, {pipeline_mode = #tpu.pipeline_mode<synchronous>, transform_indices = @transform_5, window_bounds = array<i64: 128, 128>}, {pipeline_mode = #tpu.pipeline_mode<synchronous>, transform_indices = @transform_6, window_bounds = array<i64: 1, 128>}, {transform_indices = @transform_7, window_bounds = array<i64: 32, 128>}]} {
    %c0 = arith.constant 0 : index
    %c0_0 = arith.constant 0 : index
    %0 = vector.load %arg1[%c0, %c0_0] : memref<32x64xf32, #tpu.memory_space<vmem>>, vector<32x64xf32>
    %1 = arith.truncf %0 : vector<32x64xf32> to vector<32x64xbf16>
    %c0_1 = arith.constant 0 : index
    %c0_2 = arith.constant 0 : index
    %2 = vector.load %arg2[%c0_1, %c0_2] : memref<64x128xbf16, #tpu.memory_space<vmem>>, vector<64x128xbf16>
    %cst = arith.constant dense<0.000000e+00> : vector<32x128xf32>
    %3 = tpu.matmul %1, %2, %cst {dimension_numbers = #tpu.dot_dimension_numbers<[1], [0], [0], [1], [0, 0, 1, 1], [], []>} : vector<32x64xbf16>, vector<64x128xbf16>, vector<32x128xf32> -> vector<32x128xf32>
    %c0_3 = arith.constant 0 : index
    %c0_4 = arith.constant 0 : index
    %4 = vector.load %arg3[%c0_3, %c0_4] : memref<1x128xf32, #tpu.memory_space<vmem>>, vector<1x128xf32>
    %5 = vector.broadcast %4 : vector<1x128xf32> to vector<32x128xf32>
    %6 = arith.addf %3, %5 : vector<32x128xf32>
    %cst_5 = arith.constant 0.000000e+00 : f32
    %7 = vector.broadcast %cst_5 : f32 to vector<32x128xf32>
    %8 = arith.maximumf %6, %7 : vector<32x128xf32>
    %9 = arith.truncf %8 : vector<32x128xf32> to vector<32x128xbf16>
    %c0_6 = arith.constant 0 : index
    %c0_7 = arith.constant 0 : index
    %10 = vector.load %arg4[%c0_6, %c0_7] : memref<128x128xbf16, #tpu.memory_space<vmem>>, vector<128x128xbf16>
    %cst_8 = arith.constant dense<0.000000e+00> : vector<32x128xf32>
    %11 = tpu.matmul %9, %10, %cst_8 {dimension_numbers = #tpu.dot_dimension_numbers<[1], [0], [0], [1], [0, 0, 1, 1], [], []>} : vector<32x128xbf16>, vector<128x128xbf16>, vector<32x128xf32> -> vector<32x128xf32>
    %c0_9 = arith.constant 0 : index
    %c0_10 = arith.constant 0 : index
    %12 = vector.load %arg5[%c0_9, %c0_10] : memref<1x128xf32, #tpu.memory_space<vmem>>, vector<1x128xf32>
    %13 = vector.broadcast %12 : vector<1x128xf32> to vector<32x128xf32>
    %14 = arith.addf %11, %13 : vector<32x128xf32>
    %cst_11 = arith.constant 0.000000e+00 : f32
    %15 = vector.broadcast %cst_11 : f32 to vector<32x128xf32>
    %16 = arith.maximumf %14, %15 : vector<32x128xf32>
    %17 = arith.truncf %16 : vector<32x128xf32> to vector<32x128xbf16>
    %c0_12 = arith.constant 0 : index
    %c0_13 = arith.constant 0 : index
    %18 = vector.load %arg6[%c0_12, %c0_13] : memref<128x128xbf16, #tpu.memory_space<vmem>>, vector<128x128xbf16>
    %cst_14 = arith.constant dense<0.000000e+00> : vector<32x128xf32>
    %19 = tpu.matmul %17, %18, %cst_14 {dimension_numbers = #tpu.dot_dimension_numbers<[1], [0], [0], [1], [0, 0, 1, 1], [], []>} : vector<32x128xbf16>, vector<128x128xbf16>, vector<32x128xf32> -> vector<32x128xf32>
    %c0_15 = arith.constant 0 : index
    %c0_16 = arith.constant 0 : index
    %20 = vector.load %arg7[%c0_15, %c0_16] : memref<1x128xf32, #tpu.memory_space<vmem>>, vector<1x128xf32>
    %21 = vector.broadcast %20 : vector<1x128xf32> to vector<32x128xf32>
    %22 = arith.addf %19, %21 : vector<32x128xf32>
    %c0_17 = arith.constant 0 : index
    %c0_18 = arith.constant 0 : index
    %23 = vector.load %arg8[%c0_17, %c0_18] : memref<32x128xf32, #tpu.memory_space<vmem>>, vector<32x128xf32>
    tpu.vector_store %arg8[%c0_17, %c0_18], %22 {strides = array<i32>} : memref<32x128xf32, #tpu.memory_space<vmem>>, vector<32x128xf32>,
    return
  }
  func.func @transform_0(%arg0: i32) -> (i32, i32) {
    %c0_i32 = arith.constant 0 : i32
    %c0_i32_0 = arith.constant 0 : i32
    return %arg0, %c0_i32 : i32, i32
  }
  func.func @transform_1(%arg0: i32) -> (i32, i32) {
    %c0_i32 = arith.constant 0 : i32
    %c0_i32_0 = arith.constant 0 : i32
    %c0_i32_1 = arith.constant 0 : i32
    return %c0_i32, %c0_i32_0 : i32, i32
  }
  func.func @transform_2(%arg0: i32) -> (i32, i32) {
    %c0_i32 = arith.constant 0 : i32
    %c0_i32_0 = arith.constant 0 : i32
    %c0_i32_1 = arith.constant 0 : i32
    return %c0_i32, %c0_i32_0 : i32, i32
  }
  func.func @transform_3(%arg0: i32) -> (i32, i32) {
    %c0_i32 = arith.constant 0 : i32
    %c0_i32_0 = arith.constant 0 : i32
    %c0_i32_1 = arith.constant 0 : i32
    return %c0_i32, %c0_i32_0 : i32, i32
  }
  func.func @transform_4(%arg0: i32) -> (i32, i32) {
    %c0_i32 = arith.constant 0 : i32
    %c0_i32_0 = arith.constant 0 : i32
    %c0_i32_1 = arith.constant 0 : i32
    return %c0_i32, %c0_i32_0 : i32, i32
  }
  func.func @transform_5(%arg0: i32) -> (i32, i32) {
    %c0_i32 = arith.constant 0 : i32
    %c0_i32_0 = arith.constant 0 : i32
    %c0_i32_1 = arith.constant 0 : i32
    return %c0_i32, %c0_i32_0 : i32, i32
  }
  func.func @transform_6(%arg0: i32) -> (i32, i32) {
    %c0_i32 = arith.constant 0 : i32
    %c0_i32_0 = arith.constant 0 : i32
    %c0_i32_1 = arith.constant 0 : i32
    return %c0_i32, %c0_i32_0 : i32, i32
  }
  func.func @transform_7(%arg0: i32) -> (i32, i32) {
    %c0_i32 = arith.constant 0 : i32
    %c0_i32_0 = arith.constant 0 : i32
    return %arg0, %c0_i32 : i32, i32
  }
}

</mosaic_0001>

<llo_original>
// kernel: fwd.1
$region0: #{fwd.1}
  #allocation0 [shape = 'u32[]', space=smem, size = 0x4, offset = 0x4, fixed_abs, tag = 'smem constant byte address 0x4 - core index']
  #allocation1 [shape = 'u32[144,128]{1,0:T(1,128)}', space=vmem, size = 0x12000, scoped, tag = 'internal scratch']
  %s0 = inlined_call_operand.hbm [shape: f32[64,64], index: 0, kind: input, shape index: {}]
  %s1 = inlined_call_operand.hbm [shape: bf16[64,128], index: 1, kind: input, shape index: {}]
  %s2 = inlined_call_operand.vmem [shape: f32[1,128], index: 2, kind: input, shape index: {}]
  %s3 = inlined_call_operand.hbm [shape: bf16[128,128], index: 3, kind: input, shape index: {}]
  %s4 = inlined_call_operand.vmem [shape: f32[1,128], index: 4, kind: input, shape index: {}]
  %s5 = inlined_call_operand.hbm [shape: bf16[128,128], index: 5, kind: input, shape index: {}]
  %s6 = inlined_call_operand.vmem [shape: f32[1,128], index: 6, kind: input, shape index: {}]
  %s7 = inlined_call_operand.vmem [shape: f32[64,128], index: 7, kind: output, shape index: {}]
  %s8 = sld [smem:[#allocation0]]
  $region77: #{fwd.1} parent=0
    _
  %s10 = ssub.s32 1, %s8
  %s11 = scalar_select 0, %s10, %s8
  $region1: #{fwd.1} parent=0
    #allocation2 [shape = 'u8[32768]{0}', space=vmem, size = 0x8000, scoped, tag = 'input window, operand 0']
    #allocation3 [shape = 's32[2]{0}', space=sflag, size = 0x8, scoped, tag = 'scoped memory for fwd.1']
    #allocation4 [shape = 'u8[16384]{0}', space=vmem, size = 0x4000, scoped, tag = 'input window, operand 1, single buffered']
    #allocation5 [shape = 's32[1]{0}', space=sflag, size = 0x4, scoped, tag = 'scoped memory for fwd.1']
    #allocation6 [shape = 'u8[32768]{0}', space=vmem, size = 0x8000, scoped, tag = 'input window, operand 3, single buffered']
    #allocation7 [shape = 'u8[32768]{0}', space=vmem, size = 0x8000, scoped, tag = 'input window, operand 5, single buffered']
    #allocation8 [shape = 's32[1]{0}', space=sflag, size = 0x4, scoped, tag = 'scoped memory for fwd.1']
    %12 = vsyncpa [#allocation3], 0
    %s13 = scalar_lea.sflag [#allocation3], 1
    %14 = vsyncpa %s13, 0
    %15 = vsyncpa [#allocation5], 0
    %16 = vsyncpa [#allocation8], 0
    loop: start=0, step=1, limit=4
    $region2: #{fwd.1} parent=1 // loop_pre_header
      _
    $region3: #{fwd.1} parent=1 // loop_header
      %s18 = sphi 0, %s22
      %p19 = scmp.ge.s32.totalorder %s18, 4
      %s28 = sphi 0, %s30
      %s31 = sphi 0, %s28
      %s32 = sphi 0, %s31
      %s48 = sphi 0, %s32
      %s52 = sphi 0, %s52
      %s54 = sphi 0, %s52
      %s55 = sphi 0, %s54
      %s69 = sphi 0, %s55
      %s73 = sphi 0, %s73
      %s75 = sphi 0, %s73
      %s76 = sphi 0, %s75
      %s90 = sphi 0, %s76
      %s94 = sphi 0, %s94
      %s96 = sphi 0, %s94
      %s97 = sphi 0, %s96
      %s111 = sphi 0, %s97
      %s115 = sphi 0, %s115
      %s117 = sphi 0, %s115
      %s118 = sphi 0, %s117
      %s132 = sphi 0, %s118
      %s136 = sphi 0, %s136
      %s138 = sphi 0, %s136
      %s139 = sphi 0, %s138
      %s153 = sphi 0, %s139
      %s157 = sphi 0, %s157
      %s159 = sphi 0, %s157
      %s160 = sphi 0, %s159
      %s174 = sphi 0, %s160
      %s180 = sphi 0, %s182
      %s183 = sphi 0, %s180
      %s184 = sphi 0, %s183
      %s200 = sphi 0, %s184
    $region4: #{fwd.1} parent=1 // loop_header_branch
      %21 = sbr.rel (%p19) target = $region8
    $region5: #{fwd.1} parent=1 // loop_body
      %s23 = ssub.s32 %s18, 1
      %s24 = ssub.s32 %s18, 2
      %s25 = sadd.s32 %s18, 1
      %s26 = ssub.s32 %s18, %s25
      %p27 = scmp.eq.s32.totalorder %s26, 0
      %s29 = sadd.s32 %s28, 1
      %s30 = scalar_select %p27, %s28, %s29
      %p33 = pneg %p27
      %p34 = scmp.eq.s32.totalorder %s18, 1
      %p35 = por %p33, %p34
      %p36 = scmp.ne.s32.totalorder %s28, %s31
      %p37 = scmp.eq.s32.totalorder %s18, 0
      %p38 = por %p36, %p37
      %p39 = scmp.ne.s32.totalorder %s28, %s31
      %p40 = scmp.eq.s32.totalorder %s23, 1
      %p41 = por %p39, %p40
      %p42 = scmp.ne.s32.totalorder %s31, %s32
      %p43 = scmp.eq.s32.totalorder %s23, 0
      %p44 = por %p42, %p43
      %p45 = scmp.ne.s32.totalorder %s31, %s32
      %p46 = scmp.eq.s32.totalorder %s24, 1
      %p47 = por %p45, %p46
      %p49 = scmp.ne.s32.totalorder %s32, %s48
      %p50 = scmp.eq.s32.totalorder %s24, 0
      %p51 = por %p49, %p50
      %s53 = sadd.s32 %s52, 1
      %p56 = scmp.eq.s32.totalorder %s18, 1
      %p57 = scmp.ne.s32.totalorder %s52, %s54
      %p58 = scmp.eq.s32.totalorder %s18, 0
      %p59 = por %p57, %p58
      %p60 = scmp.ne.s32.totalorder %s52, %s54
      %p61 = scmp.eq.s32.totalorder %s23, 1
      %p62 = por %p60, %p61
      %p63 = scmp.ne.s32.totalorder %s54, %s55
      %p64 = scmp.eq.s32.totalorder %s23, 0
      %p65 = por %p63, %p64
      %p66 = scmp.ne.s32.totalorder %s54, %s55
      %p67 = scmp.eq.s32.totalorder %s24, 1
      %p68 = por %p66, %p67
      %p70 = scmp.ne.s32.totalorder %s55, %s69
      %p71 = scmp.eq.s32.totalorder %s24, 0
      %p72 = por %p70, %p71
      %s74 = sadd.s32 %s73, 1
      %p77 = scmp.eq.s32.totalorder %s18, 1
      %p78 = scmp.ne.s32.totalorder %s73, %s75
      %p79 = scmp.eq.s32.totalorder %s18, 0
      %p80 = por %p78, %p79
      %p81 = scmp.ne.s32.totalorder %s73, %s75
      %p82 = scmp.eq.s32.totalorder %s23, 1
      %p83 = por %p81, %p82
      %p84 = scmp.ne.s32.totalorder %s75, %s76
      %p85 = scmp.eq.s32.totalorder %s23, 0
      %p86 = por %p84, %p85
      %p87 = scmp.ne.s32.totalorder %s75, %s76
      %p88 = scmp.eq.s32.totalorder %s24, 1
      %p89 = por %p87, %p88
      %p91 = scmp.ne.s32.totalorder %s76, %s90
      %p92 = scmp.eq.s32.totalorder %s24, 0
      %p93 = por %p91, %p92
      %s95 = sadd.s32 %s94, 1
      %p98 = scmp.eq.s32.totalorder %s18, 1
      %p99 = scmp.ne.s32.totalorder %s94, %s96
      %p100 = scmp.eq.s32.totalorder %s18, 0
      %p101 = por %p99, %p100
      %p102 = scmp.ne.s32.totalorder %s94, %s96
      %p103 = scmp.eq.s32.totalorder %s23, 1
      %p104 = por %p102, %p103
      %p105 = scmp.ne.s32.totalorder %s96, %s97
      %p106 = scmp.eq.s32.totalorder %s23, 0
      %p107 = por %p105, %p106
      %p108 = scmp.ne.s32.totalorder %s96, %s97
      %p109 = scmp.eq.s32.totalorder %s24, 1
      %p110 = por %p108, %p109
      %p112 = scmp.ne.s32.totalorder %s97, %s111
      %p113 = scmp.eq.s32.totalorder %s24, 0
      %p114 = por %p112, %p113
      %s116 = sadd.s32 %s115, 1
      %p119 = scmp.eq.s32.totalorder %s18, 1
      %p120 = scmp.ne.s32.totalorder %s115, %s117
      %p121 = scmp.eq.s32.totalorder %s18, 0
      %p122 = por %p120, %p121
      %p123 = scmp.ne.s32.totalorder %s115, %s117
      %p124 = scmp.eq.s32.totalorder %s23, 1
      %p125 = por %p123, %p124
      %p126 = scmp.ne.s32.totalorder %s117, %s118
      %p127 = scmp.eq.s32.totalorder %s23, 0
      %p128 = por %p126, %p127
      %p129 = scmp.ne.s32.totalorder %s117, %s118
      %p130 = scmp.eq.s32.totalorder %s24, 1
      %p131 = por %p129, %p130
      %p133 = scmp.ne.s32.totalorder %s118, %s132
      %p134 = scmp.eq.s32.totalorder %s24, 0
      %p135 = por %p133, %p134
      %s137 = sadd.s32 %s136, 1
      %p140 = scmp.eq.s32.totalorder %s18, 1
      %p141 = scmp.ne.s32.totalorder %s136, %s138
      %p142 = scmp.eq.s32.totalorder %s18, 0
      %p143 = por %p141, %p142
      %p144 = scmp.ne.s32.totalorder %s136, %s138
      %p145 = scmp.eq.s32.totalorder %s23, 1
      %p146 = por %p144, %p145
      %p147 = scmp.ne.s32.totalorder %s138, %s139
      %p148 = scmp.eq.s32.totalorder %s23, 0
      %p149 = por %p147, %p148
      %p150 = scmp.ne.s32.totalorder %s138, %s139
      %p151 = scmp.eq.s32.totalorder %s24, 1
      %p152 = por %p150, %p151
      %p154 = scmp.ne.s32.totalorder %s139, %s153
      %p155 = scmp.eq.s32.totalorder %s24, 0
      %p156 = por %p154, %p155
      %s158 = sadd.s32 %s157, 1
      %p161 = scmp.eq.s32.totalorder %s18, 1
      %p162 = scmp.ne.s32.totalorder %s157, %s159
      %p163 = scmp.eq.s32.totalorder %s18, 0
      %p164 = por %p162, %p163
      %p165 = scmp.ne.s32.totalorder %s157, %s159
      %p166 = scmp.eq.s32.totalorder %s23, 1
      %p167 = por %p165, %p166
      %p168 = scmp.ne.s32.totalorder %s159, %s160
      %p169 = scmp.eq.s32.totalorder %s23, 0
      %p170 = por %p168, %p169
      %p171 = scmp.ne.s32.totalorder %s159, %s160
      %p172 = scmp.eq.s32.totalorder %s24, 1
      %p173 = por %p171, %p172
      %p175 = scmp.ne.s32.totalorder %s160, %s174
      %p176 = scmp.eq.s32.totalorder %s24, 0
      %p177 = por %p175, %p176
      %s178 = ssub.s32 %s18, %s25
      %p179 = scmp.eq.s32.totalorder %s178, 0
      %s181 = sadd.s32 %s180, 1
      %s182 = scalar_select %p179, %s180, %s181
      %p185 = pneg %p179
      %p186 = scmp.eq.s32.totalorder %s18, 1
      %p187 = por %p185, %p186
      %p188 = scmp.ne.s32.totalorder %s180, %s183
      %p189 = scmp.eq.s32.totalorder %s18, 0
      %p190 = por %p188, %p189
      %p191 = scmp.ne.s32.totalorder %s180, %s183
      %p192 = scmp.eq.s32.totalorder %s23, 1
      %p193 = por %p191, %p192
      %p194 = scmp.ne.s32.totalorder %s183, %s184
      %p195 = scmp.eq.s32.totalorder %s23, 0
      %p196 = por %p194, %p195
      %p197 = scmp.ne.s32.totalorder %s183, %s184
      %p198 = scmp.eq.s32.totalorder %s24, 1
      %p199 = por %p197, %p198
      %p201 = scmp.ne.s32.totalorder %s184, %s200
      %p202 = scmp.eq.s32.totalorder %s24, 0
      %p203 = por %p201, %p202
      %p204 = scmp.le.s32.totalorder 1, %s18
      %p205 = scmp.lt.s32.totalorder %s18, 3
      %p206 = pnand %p204, %p205
      %p207 = pneg %p206
      // Predicated region
      $region9: #{fwd.1} parent=5 // pred_check
        _
      $region10: #{fwd.1} parent=5 // pred_check_branch
        %209 = sbr.rel (%p206) target = $region12
      $region11: #{fwd.1} parent=5 // pred_region
        %s210 = ssub.s32 %s18, 1
        // Predicated region
        $region13: #{fwd.1} parent=11 // pred_check
          %p211 = pneg %p65
        $region14: #{fwd.1} parent=11 // pred_check_branch
          %213 = sbr.rel (%p211) target = $region16
        $region15: #{fwd.1} parent=11 // pred_region
          %s215 = ssub.s32 512, 512
          %216 = vsyncadd [#allocation5], %s215
          %s217 = sshll.u32 [#allocation4], 4
          %s218 = int_to_ptr.vmem [resolvable:$true] %s217
          %223 = dma.hbm_to_vmem [thread:$0]  %s1, 512, %s218, [#allocation5], 64, 64, 4
        $region16: #{fwd.1} parent=11 // pred_fallthru
          _
        // Predicated region
        $region17: #{fwd.1} parent=11 // pred_check
          %p224 = pneg %p86
        $region18: #{fwd.1} parent=11 // pred_check_branch
          %226 = sbr.rel (%p224) target = $region20
        $region19: #{fwd.1} parent=11 // pred_region
          _
        $region20: #{fwd.1} parent=11 // pred_fallthru
          _
        // Predicated region
        $region21: #{fwd.1} parent=11 // pred_check
          %p227 = pneg %p107
        $region22: #{fwd.1} parent=11 // pred_check_branch
          %229 = sbr.rel (%p227) target = $region24
        $region23: #{fwd.1} parent=11 // pred_region
          %s231 = ssub.s32 1024, 1024
          %232 = vsyncadd [#allocation5], %s231
          %s233 = sshll.u32 [#allocation6], 4
          %s234 = int_to_ptr.vmem [resolvable:$true] %s233
          %239 = dma.hbm_to_vmem [thread:$0]  %s3, 1024, %s234, [#allocation5], 64, 64, 4
        $region24: #{fwd.1} parent=11 // pred_fallthru
          _
        // Predicated region
        $region25: #{fwd.1} parent=11 // pred_check
          %p240 = pneg %p128
        $region26: #{fwd.1} parent=11 // pred_check_branch
          %242 = sbr.rel (%p240) target = $region28
        $region27: #{fwd.1} parent=11 // pred_region
          _
        $region28: #{fwd.1} parent=11 // pred_fallthru
          _
        // Predicated region
        $region29: #{fwd.1} parent=11 // pred_check
          %p243 = pneg %p149
        $region30: #{fwd.1} parent=11 // pred_check_branch
          %245 = sbr.rel (%p243) target = $region32
        $region31: #{fwd.1} parent=11 // pred_region
          %s247 = ssub.s32 1024, 1024
          %248 = vsyncadd [#allocation8], %s247
          %s249 = sshll.u32 [#allocation7], 4
          %s250 = int_to_ptr.vmem [resolvable:$true] %s249
          %255 = dma.hbm_to_vmem [thread:$0]  %s5, 1024, %s250, [#allocation8], 64, 64, 4
        $region32: #{fwd.1} parent=11 // pred_fallthru
          _
        // Predicated region
        $region33: #{fwd.1} parent=11 // pred_check
          %p256 = pneg %p170
        $region34: #{fwd.1} parent=11 // pred_check_branch
          %258 = sbr.rel (%p256) target = $region36
        $region35: #{fwd.1} parent=11 // pred_region
          _
        $region36: #{fwd.1} parent=11 // pred_fallthru
          _
      $region12: #{fwd.1} parent=5 // pred_fallthru
        _
      %p259 = scmp.lt.s32.totalorder %s18, 2
      // Predicated region
      $region37: #{fwd.1} parent=5 // pred_check
        %p260 = pneg %p259
      $region38: #{fwd.1} parent=5 // pred_check_branch
        %262 = sbr.rel (%p260) target = $region40
      $region39: #{fwd.1} parent=5 // pred_region
        // Predicated region
        $region41: #{fwd.1} parent=39 // pred_check
          %p263 = pneg %p38
        $region42: #{fwd.1} parent=39 // pred_check_branch
          %265 = sbr.rel (%p263) target = $region44
        $region43: #{fwd.1} parent=39 // pred_region
          %s266 = sand.u32 %s28, 1
          %s267 = scalar_lea.sflag [#allocation3], %s266
          %s268 = sand.u32 %s28, 1
          %s269 = smul.addr %s268, 32
          %s270 = scalar_lea.vmem [#allocation2], %s269
          %s271 = smul.u32 4, %s18
          %s273 = ssub.s32 512, 512
          %274 = vsyncadd %s267, %s273
          %s275 = smul.addr %s271, 128
          %s276 = scalar_lea.hbm %s0, %s275
          %s277 = sshll.u32 %s270, 4
          %s278 = int_to_ptr.vmem [resolvable:$true] %s277
          %283 = dma.hbm_to_vmem [thread:$0]  %s276, 512, %s278, %s267, 128, 128, 8
        $region44: #{fwd.1} parent=39 // pred_fallthru
          _
      $region40: #{fwd.1} parent=5 // pred_fallthru
        _
      %p284 = scmp.le.s32.totalorder 1, %s18
      %p285 = scmp.lt.s32.totalorder %s18, 3
      %p286 = pnand %p284, %p285
      %p287 = pneg %p286
      // Predicated region
      $region45: #{fwd.1} parent=5 // pred_check
        _
      $region46: #{fwd.1} parent=5 // pred_check_branch
        %289 = sbr.rel (%p286) target = $region48
      $region47: #{fwd.1} parent=5 // pred_region
        %s290 = ssub.s32 %s18, 1
        %s291 = sand.u32 %s31, 1
        %s292 = scalar_lea.sflag [#allocation3], %s291
        %s293 = sand.u32 %s31, 1
        %s294 = smul.addr %s293, 32
        %s295 = scalar_lea.vmem [#allocation2], %s294
        // Predicated region
        $region49: #{fwd.1} parent=47 // pred_check
          %p296 = pneg %p44
        $region50: #{fwd.1} parent=47 // pred_check_branch
          %298 = sbr.rel (%p296) target = $region52
        $region51: #{fwd.1} parent=47 // pred_region
          %299 = dma.done %s292, 512
        $region52: #{fwd.1} parent=47 // pred_fallthru
          _
        // Predicated region
        $region53: #{fwd.1} parent=47 // pred_check
          %p300 = pneg %p65
        $region54: #{fwd.1} parent=47 // pred_check_branch
          %302 = sbr.rel (%p300) target = $region56
        $region55: #{fwd.1} parent=47 // pred_region
          %303 = dma.done [#allocation5], 512
        $region56: #{fwd.1} parent=47 // pred_fallthru
          _
        // Predicated region
        $region57: #{fwd.1} parent=47 // pred_check
          %p304 = pneg %p107
        $region58: #{fwd.1} parent=47 // pred_check_branch
          %306 = sbr.rel (%p304) target = $region60
        $region59: #{fwd.1} parent=47 // pred_region
          %307 = dma.done [#allocation5], 1024
        $region60: #{fwd.1} parent=47 // pred_fallthru
          _
        // Predicated region
        $region61: #{fwd.1} parent=47 // pred_check
          %p308 = pneg %p149
        $region62: #{fwd.1} parent=47 // pred_check_branch
          %310 = sbr.rel (%p308) target = $region64
        $region63: #{fwd.1} parent=47 // pred_region
          %311 = dma.done [#allocation8], 1024
        $region64: #{fwd.1} parent=47 // pred_fallthru
          _
        %s312 = sand.u32 %s31, 1
        %s313 = scalar_lea.sflag [#allocation3], %s312
        %s314 = sand.u32 %s31, 1
        %s315 = smul.addr %s314, 32
        %s316 = scalar_lea.vmem [#allocation2], %s315
        %p317 = pneg %p44
        %p318 = pneg %p41
        %p319 = pneg %p65
        %p320 = pneg %p62
        %p321 = pneg %p86
        %p322 = pneg %p83
        %p323 = pneg %p107
        %p324 = pneg %p104
        %p325 = pneg %p128
        %p326 = pneg %p125
        %p327 = pneg %p149
        %p328 = pneg %p146
        %p329 = pneg %p170
        %p330 = pneg %p167
        %p331 = pneg %p196
        %p332 = pneg %p193
        %s333 = smul.u32 4, %s23
        %p334 = scmp.lt.s32.totalorder %s333, 7
        %s335 = scalar_select %p334, %s333, 7
        %s336 = smul.addr %s335, 8
        %s337 = scalar_lea.vmem %s7, %s336
        %s338 = smul.u32 4, %s23
        %s339 = smul.u32 4, %s23
        %p340 = scmp.lt.s32.totalorder %s339, 7
        %s341 = scalar_select %p340, %s339, 7
        %s342 = smul.addr %s341, 8
        %s343 = scalar_lea.vmem %s7, %s342
        %s344 = smul.u32 4, %s23
        %v346 = vld [vmem:[%s295] sm:$0xff]
        %v347 = vld [vmem:[%s295 + $0x8] sm:$0xff]
        %v348 = vld [vmem:[%s295 + $0x10] sm:$0xff]
        %v349 = vld [vmem:[%s295 + $0x18] sm:$0xff]
        %v350 = vpack.c.bf16 %v347, %v346
        %v351 = vpack.c.bf16 %v349, %v348
        %v352 = vld [vmem:[#allocation4] sm:$0xf]
        %v353 = vld [vmem:[#allocation4 + $0x4] sm:$0xf]
        %v354 = vld [vmem:[#allocation4 + $0x8] sm:$0xf]
        %v355 = vld [vmem:[#allocation4 + $0xc] sm:$0xf]
        %v356 = vld [vmem:[#allocation4 + $0x10] sm:$0xf]
        %v357 = vld [vmem:[#allocation4 + $0x14] sm:$0xf]
        %v358 = vld [vmem:[#allocation4 + $0x18] sm:$0xf]
        %v359 = vld [vmem:[#allocation4 + $0x1c] sm:$0xf]
        %v360 = vld [vmem:[%s2] sm:$0x1]
        %v362 = vlaneseq
        %v363 = vshrl.u32 %v362, 7
        %v364 = vsub.s32 0, %v363
        %v365 = vrot.slane %v360, %v364
        %v375 = vunpack.c.l.b16 %v352
        %v376 = vunpack.c.l.b16 %v353
        %v377 = vunpack.c.l.b16 %v354
        %v378 = vunpack.c.l.b16 %v355
        %v379 = vunpack.c.l.b16 %v356
        %v380 = vunpack.c.l.b16 %v357
        %v381 = vunpack.c.l.b16 %v358
        %v382 = vunpack.c.l.b16 %v359
        %v383 = vpack.c.b16 %v376, %v375
        %v384 = vpack.c.b16 %v378, %v377
        %v385 = vpack.c.b16 %v380, %v379
        %v386 = vpack.c.b16 %v382, %v381
        %vm391 = vcmask 523264
        %v393 = vsel %vm391, %v350, 0
        %v396 = vsel %vm391, %v351, 0
        %398 = vmatprep.subr.bf16.mxu0 0
        %399 = vmatpush1.bf16.msra.mxu0 0
        %400 = vmatprep.subr.bf16.mxu0 0
        %401 = vmatpush1.bf16.msra.mxu0 0
        %402 = vmatprep.subr.bf16.mxu0 0
        %403 = vmatpush1.bf16.msra.mxu0 0
        %404 = vmatprep.subr.bf16.mxu0 0
        %405 = vmatpush1.bf16.msra.mxu0 0
        %406 = vmatprep.subr.bf16.mxu0 0
        %407 = vmatpush1.bf16.msra.mxu0 %v386
        %408 = vmatprep.subr.bf16.mxu0 0
        %409 = vmatpush1.bf16.msra.mxu0 %v385
        %410 = vmatprep.subr.bf16.mxu0 0
        %411 = vmatpush1.bf16.msra.mxu0 %v384
        %412 = vmatprep.subr.bf16.mxu0 0
        %413 = vmatpush1.bf16.msra.mxu0 %v383
        %414 = vmatprep.subr.bf16.mxu0 0
        %415 = vmatpush2.bf16.msra.mxu0 0
        %416 = vmatprep.subr.bf16.mxu0 0
        %417 = vmatpush2.bf16.msra.mxu0 0
        %418 = vmatprep.subr.bf16.mxu0 0
        %419 = vmatpush2.bf16.msra.mxu0 0
        %420 = vmatprep.subr.bf16.mxu0 0
        %421 = vmatpush2.bf16.msra.mxu0 0
        %422 = vmatprep.subr.bf16.mxu0 0
        %423 = vmatpush2.bf16.msra.mxu0 0
        %424 = vmatprep.subr.bf16.mxu0 0
        %425 = vmatpush2.bf16.msra.mxu0 0
        %426 = vmatprep.subr.bf16.mxu0 0
        %427 = vmatpush2.bf16.msra.mxu0 0
        %428 = vmatprep.subr.bf16.mxu0 0
        %429 = vmatpush2.bf16.msra.mxu0 0
        %430 = vmatprep.mubr.bf16.mxu0 0
        %431 = vmatmul.mubr.bf16.gmra.mxu0 %v393
        %v432 = vpop.f32.mrf.mxu0
        %v433 = vadd.f32 %v365, %v432
        %v434 = vpop.f32.mrf.mxu0
        %v435 = vpop.f32.mrf.mxu0
        %v436 = vadd.f32 %v365, %v435
        %v437 = vpop.f32.mrf.mxu0
        %438 = vmatprep.mubr.bf16.mxu0 0
        %439 = vmatmul.mubr.bf16.gmra.mxu0 %v396
        %v440 = vpop.f32.mrf.mxu0
        %v441 = vadd.f32 %v365, %v440
        %v442 = vpop.f32.mrf.mxu0
        %v443 = vpop.f32.mrf.mxu0
        %v444 = vadd.f32 %v365, %v443
        %v445 = vpop.f32.mrf.mxu0
        %446 = vdwg.mxu0
        %v447 = vmax.f32 %v433, 0.0
        %v448 = vmax.f32 %v436, 0.0
        %v449 = vmax.f32 %v441, 0.0
        %v450 = vmax.f32 %v444, 0.0
        %v451 = vpack.c.bf16 %v448, %v447
        %v452 = vpack.c.bf16 %v450, %v449
        %v453 = vld [vmem:[#allocation6] sm:$0xf]
        %v454 = vld [vmem:[#allocation6 + $0x4] sm:$0xf]
        %v455 = vld [vmem:[#allocation6 + $0x8] sm:$0xf]
        %v456 = vld [vmem:[#allocation6 + $0xc] sm:$0xf]
        %v457 = vld [vmem:[#allocation6 + $0x10] sm:$0xf]
        %v458 = vld [vmem:[#allocation6 + $0x14] sm:$0xf]
        %v459 = vld [vmem:[#allocation6 + $0x18] sm:$0xf]
        %v460 = vld [vmem:[#allocation6 + $0x1c] sm:$0xf]
        %v461 = vld [vmem:[#allocation6 + $0x20] sm:$0xf]
        %v462 = vld [vmem:[#allocation6 + $0x24] sm:$0xf]
        %v463 = vld [vmem:[#allocation6 + $0x28] sm:$0xf]
        %v464 = vld [vmem:[#allocation6 + $0x2c] sm:$0xf]
        %v465 = vld [vmem:[#allocation6 + $0x30] sm:$0xf]
        %v466 = vld [vmem:[#allocation6 + $0x34] sm:$0xf]
        %v467 = vld [vmem:[#allocation6 + $0x38] sm:$0xf]
        %v468 = vld [vmem:[#allocation6 + $0x3c] sm:$0xf]
        %v469 = vld [vmem:[%s4] sm:$0x1]
        %v471 = vlaneseq
        %v472 = vshrl.u32 %v471, 7
        %v473 = vsub.s32 0, %v472
        %v474 = vrot.slane %v469, %v473
        %v492 = vunpack.c.l.b16 %v453
        %v493 = vunpack.c.l.b16 %v454
        %v494 = vunpack.c.l.b16 %v455
        %v495 = vunpack.c.l.b16 %v456
        %v496 = vunpack.c.l.b16 %v457
        %v497 = vunpack.c.l.b16 %v458
        %v498 = vunpack.c.l.b16 %v459
        %v499 = vunpack.c.l.b16 %v460
        %v500 = vunpack.c.l.b16 %v461
        %v501 = vunpack.c.l.b16 %v462
        %v502 = vunpack.c.l.b16 %v463
        %v503 = vunpack.c.l.b16 %v464
        %v504 = vunpack.c.l.b16 %v465
        %v505 = vunpack.c.l.b16 %v466
        %v506 = vunpack.c.l.b16 %v467
        %v507 = vunpack.c.l.b16 %v468
        %v508 = vpack.c.b16 %v493, %v492
        %v509 = vpack.c.b16 %v495, %v494
        %v510 = vpack.c.b16 %v497, %v496
        %v511 = vpack.c.b16 %v499, %v498
        %v512 = vpack.c.b16 %v501, %v500
        %v513 = vpack.c.b16 %v503, %v502
        %v514 = vpack.c.b16 %v505, %v504
        %v515 = vpack.c.b16 %v507, %v506
        %524 = vmatprep.subr.bf16.mxu0 0
        %525 = vmatpush1.bf16.msra.mxu0 %v515
        %526 = vmatprep.subr.bf16.mxu0 0
        %527 = vmatpush1.bf16.msra.mxu0 %v514
        %528 = vmatprep.subr.bf16.mxu0 0
        %529 = vmatpush1.bf16.msra.mxu0 %v513
        %530 = vmatprep.subr.bf16.mxu0 0
        %531 = vmatpush1.bf16.msra.mxu0 %v512
        %532 = vmatprep.subr.bf16.mxu0 0
        %533 = vmatpush1.bf16.msra.mxu0 %v511
        %534 = vmatprep.subr.bf16.mxu0 0
        %535 = vmatpush1.bf16.msra.mxu0 %v510
        %536 = vmatprep.subr.bf16.mxu0 0
        %537 = vmatpush1.bf16.msra.mxu0 %v509
        %538 = vmatprep.subr.bf16.mxu0 0
        %539 = vmatpush1.bf16.msra.mxu0 %v508
        %540 = vmatprep.subr.bf16.mxu0 0
        %541 = vmatpush2.bf16.msra.mxu0 0
        %542 = vmatprep.subr.bf16.mxu0 0
        %543 = vmatpush2.bf16.msra.mxu0 0
        %544 = vmatprep.subr.bf16.mxu0 0
        %545 = vmatpush2.bf16.msra.mxu0 0
        %546 = vmatprep.subr.bf16.mxu0 0
        %547 = vmatpush2.bf16.msra.mxu0 0
        %548 = vmatprep.subr.bf16.mxu0 0
        %549 = vmatpush2.bf16.msra.mxu0 0
        %550 = vmatprep.subr.bf16.mxu0 0
        %551 = vmatpush2.bf16.msra.mxu0 0
        %552 = vmatprep.subr.bf16.mxu0 0
        %553 = vmatpush2.bf16.msra.mxu0 0
        %554 = vmatprep.subr.bf16.mxu0 0
        %555 = vmatpush2.bf16.msra.mxu0 0
        %556 = vmatprep.mubr.bf16.mxu0 0
        %557 = vmatmul.mubr.bf16.gmra.mxu0 %v451
        %v558 = vpop.f32.mrf.mxu0
        %v559 = vadd.f32 %v474, %v558
        %v560 = vpop.f32.mrf.mxu0
        %v561 = vpop.f32.mrf.mxu0
        %v562 = vadd.f32 %v474, %v561
        %v563 = vpop.f32.mrf.mxu0
        %564 = vmatprep.mubr.bf16.mxu0 0
        %565 = vmatmul.mubr.bf16.gmra.mxu0 %v452
        %v566 = vpop.f32.mrf.mxu0
        %v567 = vadd.f32 %v474, %v566
        %v568 = vpop.f32.mrf.mxu0
        %v569 = vpop.f32.mrf.mxu0
        %v570 = vadd.f32 %v474, %v569
        %v571 = vpop.f32.mrf.mxu0
        %572 = vdwg.mxu0
        %v573 = vmax.f32 %v559, 0.0
        %v574 = vmax.f32 %v562, 0.0
        %v575 = vmax.f32 %v567, 0.0
        %v576 = vmax.f32 %v570, 0.0
        %v577 = vpack.c.bf16 %v574, %v573
        %v578 = vpack.c.bf16 %v576, %v575
        %v579 = vld [vmem:[#allocation7] sm:$0xf]
        %v580 = vld [vmem:[#allocation7 + $0x4] sm:$0xf]
        %v581 = vld [vmem:[#allocation7 + $0x8] sm:$0xf]
        %v582 = vld [vmem:[#allocation7 + $0xc] sm:$0xf]
        %v583 = vld [vmem:[#allocation7 + $0x10] sm:$0xf]
        %v584 = vld [vmem:[#allocation7 + $0x14] sm:$0xf]
        %v585 = vld [vmem:[#allocation7 + $0x18] sm:$0xf]
        %v586 = vld [vmem:[#allocation7 + $0x1c] sm:$0xf]
        %v587 = vld [vmem:[#allocation7 + $0x20] sm:$0xf]
        %v588 = vld [vmem:[#allocation7 + $0x24] sm:$0xf]
        %v589 = vld [vmem:[#allocation7 + $0x28] sm:$0xf]
        %v590 = vld [vmem:[#allocation7 + $0x2c] sm:$0xf]
        %v591 = vld [vmem:[#allocation7 + $0x30] sm:$0xf]
        %v592 = vld [vmem:[#allocation7 + $0x34] sm:$0xf]
        %v593 = vld [vmem:[#allocation7 + $0x38] sm:$0xf]
        %v594 = vld [vmem:[#allocation7 + $0x3c] sm:$0xf]
        %v595 = vld [vmem:[%s6] sm:$0x1]
        %v597 = vlaneseq
        %v598 = vshrl.u32 %v597, 7
        %v599 = vsub.s32 0, %v598
        %v600 = vrot.slane %v595, %v599
        %v618 = vunpack.c.l.b16 %v579
        %v619 = vunpack.c.l.b16 %v580
        %v620 = vunpack.c.l.b16 %v581
        %v621 = vunpack.c.l.b16 %v582
        %v622 = vunpack.c.l.b16 %v583
        %v623 = vunpack.c.l.b16 %v584
        %v624 = vunpack.c.l.b16 %v585
        %v625 = vunpack.c.l.b16 %v586
        %v626 = vunpack.c.l.b16 %v587
        %v627 = vunpack.c.l.b16 %v588
        %v628 = vunpack.c.l.b16 %v589
        %v629 = vunpack.c.l.b16 %v590
        %v630 = vunpack.c.l.b16 %v591
        %v631 = vunpack.c.l.b16 %v592
        %v632 = vunpack.c.l.b16 %v593
        %v633 = vunpack.c.l.b16 %v594
        %v634 = vpack.c.b16 %v619, %v618
        %v635 = vpack.c.b16 %v621, %v620
        %v636 = vpack.c.b16 %v623, %v622
        %v637 = vpack.c.b16 %v625, %v624
        %v638 = vpack.c.b16 %v627, %v626
        %v639 = vpack.c.b16 %v629, %v628
        %v640 = vpack.c.b16 %v631, %v630
        %v641 = vpack.c.b16 %v633, %v632
        %650 = vmatprep.subr.bf16.mxu0 0
        %651 = vmatpush1.bf16.msra.mxu0 %v641
        %652 = vmatprep.subr.bf16.mxu0 0
        %653 = vmatpush1.bf16.msra.mxu0 %v640
        %654 = vmatprep.subr.bf16.mxu0 0
        %655 = vmatpush1.bf16.msra.mxu0 %v639
        %656 = vmatprep.subr.bf16.mxu0 0
        %657 = vmatpush1.bf16.msra.mxu0 %v638
        %658 = vmatprep.subr.bf16.mxu0 0
        %659 = vmatpush1.bf16.msra.mxu0 %v637
        %660 = vmatprep.subr.bf16.mxu0 0
        %661 = vmatpush1.bf16.msra.mxu0 %v636
        %662 = vmatprep.subr.bf16.mxu0 0
        %663 = vmatpush1.bf16.msra.mxu0 %v635
        %664 = vmatprep.subr.bf16.mxu0 0
        %665 = vmatpush1.bf16.msra.mxu0 %v634
        %666 = vmatprep.subr.bf16.mxu0 0
        %667 = vmatpush2.bf16.msra.mxu0 0
        %668 = vmatprep.subr.bf16.mxu0 0
        %669 = vmatpush2.bf16.msra.mxu0 0
        %670 = vmatprep.subr.bf16.mxu0 0
        %671 = vmatpush2.bf16.msra.mxu0 0
        %672 = vmatprep.subr.bf16.mxu0 0
        %673 = vmatpush2.bf16.msra.mxu0 0
        %674 = vmatprep.subr.bf16.mxu0 0
        %675 = vmatpush2.bf16.msra.mxu0 0
        %676 = vmatprep.subr.bf16.mxu0 0
        %677 = vmatpush2.bf16.msra.mxu0 0
        %678 = vmatprep.subr.bf16.mxu0 0
        %679 = vmatpush2.bf16.msra.mxu0 0
        %680 = vmatprep.subr.bf16.mxu0 0
        %681 = vmatpush2.bf16.msra.mxu0 0
        %682 = vmatprep.mubr.bf16.mxu0 0
        %683 = vmatmul.mubr.bf16.gmra.mxu0 %v577
        %v684 = vpop.f32.mrf.mxu0
        %v685 = vadd.f32 %v600, %v684
        %v686 = vpop.f32.mrf.mxu0
        %v687 = vpop.f32.mrf.mxu0
        %v688 = vadd.f32 %v600, %v687
        %v689 = vpop.f32.mrf.mxu0
        %690 = vmatprep.mubr.bf16.mxu0 0
        %691 = vmatmul.mubr.bf16.gmra.mxu0 %v578
        %v692 = vpop.f32.mrf.mxu0
        %v693 = vadd.f32 %v600, %v692
        %v694 = vpop.f32.mrf.mxu0
        %v695 = vpop.f32.mrf.mxu0
        %v696 = vadd.f32 %v600, %v695
        %v697 = vpop.f32.mrf.mxu0
        %698 = vdwg.mxu0
        %699 = vst [vmem:[%s343] sm:$0xff] %v685
        %700 = vst [vmem:[%s343 + $0x8] sm:$0xff] %v688
        %701 = vst [vmem:[%s343 + $0x10] sm:$0xff] %v693
        %702 = vst [vmem:[%s343 + $0x18] sm:$0xff] %v696
        %s703 = smul.u32 4, %s23
        %p704 = scmp.lt.s32.totalorder %s703, 7
        %s705 = scalar_select %p704, %s703, 7
        %s706 = smul.addr %s705, 8
        %s707 = scalar_lea.vmem %s7, %s706
        // Predicated region
        $region65: #{fwd.1} parent=47 // pred_check
          %p708 = pneg %p193
        $region66: #{fwd.1} parent=47 // pred_check_branch
          %710 = sbr.rel (%p708) target = $region68
        $region67: #{fwd.1} parent=47 // pred_region
          %s711 = smul.u32 4, %s23
        $region68: #{fwd.1} parent=47 // pred_fallthru
          _
      $region48: #{fwd.1} parent=5 // pred_fallthru
        _
      %p712 = scmp.le.s32.totalorder 2, %s18
      // Predicated region
      $region69: #{fwd.1} parent=5 // pred_check
        %p713 = pneg %p712
      $region70: #{fwd.1} parent=5 // pred_check_branch
        %715 = sbr.rel (%p713) target = $region72
      $region71: #{fwd.1} parent=5 // pred_region
        %s716 = ssub.s32 %s18, 2
        // Predicated region
        $region73: #{fwd.1} parent=71 // pred_check
          %p717 = pneg %p199
        $region74: #{fwd.1} parent=71 // pred_check_branch
          %719 = sbr.rel (%p717) target = $region76
        $region75: #{fwd.1} parent=71 // pred_region
          %s720 = smul.u32 4, %s24
          %p721 = scmp.lt.s32.totalorder %s720, 7
          %s722 = scalar_select %p721, %s720, 7
          %s723 = smul.addr %s722, 8
          %s724 = scalar_lea.vmem %s7, %s723
        $region76: #{fwd.1} parent=71 // pred_fallthru
          _
      $region72: #{fwd.1} parent=5 // pred_fallthru
        _
    $region6: #{fwd.1} parent=1 // loop_footer
      %s22 = sadd.s32 1, %s18
    $region7: #{fwd.1} parent=1 // loop_footer_branch
      %17 = sbr.rel target = $region3
    $region8: #{fwd.1} parent=1 // loop_exit
      _
    %725 = vsyncpa [#allocation3], 1
    %s726 = scalar_lea.sflag [#allocation3], 1
    %727 = vsyncpa %s726, 1
    %728 = vsyncpa [#allocation5], 1
    %729 = vsyncpa [#allocation8], 1

</llo_original>
